<compile_context>
chip_gen: v5e
topology: v5e:2x2
jax: 0.10.0
libtpu: 0.0.40
codegen_flags: <defaults>
</compile_context>

<pallas_src>
import functools

import jax
import jax.numpy as jnp
from jax.experimental import pallas as pl
from jax.experimental.pallas import tpu as pltpu


def _ce_label_smooth_kernel(logits_ref, labels_ref, out_ref, *,
                            epsilon, num_classes, n_rows, block_rows, inv_denom):
    """One row-tile of the smoothed-CE reduction.

    logits_ref: (TN, K) native-dtype VMEM tile
    labels_ref: (TN, 1) int32 VMEM tile
    out_ref   : (1, 1)  float32 resident accumulator (same block every grid step)
    """
    pid = pl.program_id(0)

    @pl.when(pid == 0)
    def _():
        out_ref[...] = jnp.zeros_like(out_ref)

    x = logits_ref[...].astype(jnp.float32)                    # free-ish VPU cast
    tn, k = x.shape

    # Per-row scalars only -- never materialize log_probs or the smoothed one-hot.
    m = jnp.max(x, axis=-1, keepdims=True)                     # (TN, 1)
    lse = jnp.log(jnp.sum(jnp.exp(x - m), axis=-1, keepdims=True))
    sum_x = jnp.sum(x, axis=-1, keepdims=True)                 # (TN, 1)

    # x at the label position via a single masked reduction (no scatter / matmul).
    lane = jax.lax.broadcasted_iota(jnp.int32, (tn, k), 1)
    x_label = jnp.sum(jnp.where(lane == labels_ref[...], x, 0.0),
                      axis=-1, keepdims=True)                  # (TN, 1)

    # loss_row = -[(1-eps)*(x[label]-m-lse) + (eps/K)*(sum_x - K*(m+lse))]
    kf = jnp.float32(num_classes)
    row_loss = -((1.0 - epsilon) * (x_label - m - lse)
                 + (epsilon / kf) * (sum_x - kf * (m + lse)))  # (TN, 1)

    # Mask padded rows of the last partial tile (select is NaN-safe).
    row_ids = pid * block_rows + jax.lax.broadcasted_iota(jnp.int32, (tn, 1), 0)
    row_loss = jnp.where(row_ids < n_rows, row_loss, 0.0)

    out_ref[...] = out_ref[...] + jnp.sum(row_loss)

    @pl.when(pid == pl.num_programs(0) - 1)
    def _():
        out_ref[...] = out_ref[...] * inv_denom


def cross_entropy_label_smooth(inputs, targets, *, epsilon=0.1, block_rows=None,
                               vmem_block_budget_bytes=4 << 20):
    """inputs: (B, S, K) float logits; targets: (B, S) int labels -> scalar f32 loss."""
    b, s, k = inputs.shape
    n = b * s
    # Keep the native dtype: no f32 copy in HBM; the kernel casts in-register.
    logits2d = inputs.reshape(n, k)
    labels2d = targets.reshape(n, 1).astype(jnp.int32)

    itemsize = jnp.dtype(logits2d.dtype).itemsize
    if block_rows is None:
        # Keep a double-buffered logits tile well under the scoped-VMEM limit on
        # every generation (v7x has only 64 MiB physical / 32 MiB scoped default).
        rows_fit = max(int(vmem_block_budget_bytes // max(k * itemsize, 1)), 8)
        block_rows = min(n, 1024, rows_fit)
    block_rows = min(int(block_rows), n)
    if block_rows < n:
        block_rows = max(8, (block_rows // 8) * 8)   # sublane-aligned when tiling
    num_tiles = pl.cdiv(n, block_rows)

    kernel = functools.partial(
        _ce_label_smooth_kernel,
        epsilon=float(epsilon),
        num_classes=int(k),
        n_rows=int(n),
        block_rows=int(block_rows),
        inv_denom=float(1.0 / n),
    )

    out = pl.pallas_call(
        kernel,
        out_shape=jax.ShapeDtypeStruct((1, 1), jnp.float32),
        grid_spec=pltpu.PrefetchScalarGridSpec(
            num_scalar_prefetch=0,
            grid=(num_tiles,),
            in_specs=[
                pl.BlockSpec((block_rows, k), lambda i: (i, 0)),
                pl.BlockSpec((block_rows, 1), lambda i: (i, 0)),
            ],
            out_specs=pl.BlockSpec((1, 1), lambda i: (0, 0)),
        ),
        compiler_params=pltpu.CompilerParams(
            dimension_semantics=("arbitrary",),      # output is a resident accumulator
            vmem_limit_bytes=32 * 1024 * 1024,
        ),
    )(logits2d, labels2d)
    return out[0, 0]


def _reference(inputs, targets, epsilon=0.1):
    """Pure-JAX reference mirroring the PyTorch forward exactly."""
    k = inputs.shape[-1]
    log_probs = jax.nn.log_softmax(inputs.astype(jnp.float32), axis=2)
    onehot = jax.nn.one_hot(targets, k, dtype=jnp.float32)
    smooth = (1.0 - epsilon) * onehot + epsilon / k
    return (-smooth * log_probs).mean(0).mean(0).sum()


if __name__ == "__main__":
    key = jax.random.PRNGKey(0)
    k1, k2, k3, k4 = jax.random.split(key, 4)

    # Case 1: B=2, S=8, K=32 (single row tile).
    B, S, K = 2, 8, 32
    inputs = jax.random.normal(k1, (B, S, K), dtype=jnp.float32)
    targets = jax.random.randint(k2, (B, S), 0, K, dtype=jnp.int32)
    loss = jax.block_until_ready(cross_entropy_label_smooth(inputs, targets, epsilon=0.1))
    ref = _reference(inputs, targets, epsilon=0.1)
    assert jnp.allclose(loss, ref, atol=1e-4, rtol=1e-4), (loss, ref)

    # Case 2: exercise the row grid + partial-tile masking (N=18 rows, tile=8 -> 3 tiles).
    B2, S2, K2 = 2, 9, 32
    inputs2 = jax.random.normal(k3, (B2, S2, K2), dtype=jnp.float32)
    targets2 = jax.random.randint(k4, (B2, S2), 0, K2, dtype=jnp.int32)
    loss2 = jax.block_until_ready(
        cross_entropy_label_smooth(inputs2, targets2, epsilon=0.1, block_rows=8))
    ref2 = _reference(inputs2, targets2, epsilon=0.1)
    assert jnp.allclose(loss2, ref2, atol=1e-4, rtol=1e-4), (loss2, ref2)

    print("KERNEL_OK")
</pallas_src>

<mosaic_0001>
module attributes {stable_mosaic.version = 11 : i64} {
  func.func @_ce_label_smooth_kernel(%arg0: i32, %arg1: memref<16x32xf32, #tpu.memory_space<vmem>>, %arg2: memref<16x1xi32, #tpu.memory_space<vmem>>, %arg3: memref<1x1xf32, #tpu.memory_space<vmem>>) attributes {dimension_semantics = [#tpu.dimension_semantics<arbitrary>], iteration_bounds = array<i64: 1>, scalar_prefetch = 0 : i64, scratch_operands = 0 : i64, tpu.core_type = #tpu.core_type<tc>, window_params = [{transform_indices = @transform_0, window_bounds = array<i64: 16, 32>}, {transform_indices = @transform_1, window_bounds = array<i64: 16, 1>}, {pipeline_mode = #tpu.pipeline_mode<synchronous>, transform_indices = @transform_2, window_bounds = array<i64: 1, 1>}]} {
    %c0_i32 = arith.constant 0 : i32
    %0 = arith.cmpi eq, %arg0, %c0_i32 : i32
    %1 = arith.extui %0 : i1 to i32
    %c0_i32_0 = arith.constant 0 : i32
    %2 = arith.cmpi ne, %1, %c0_i32_0 : i32
    scf.if %2 {
      %cst_22 = arith.constant 0.000000e+00 : f32
      %55 = vector.broadcast %cst_22 : f32 to vector<1x1xf32>
      %c0_23 = arith.constant 0 : index
      %c0_24 = arith.constant 0 : index
      %56 = vector.load %arg3[%c0_23, %c0_24] : memref<1x1xf32, #tpu.memory_space<vmem>>, vector<1x1xf32>
      tpu.vector_store %arg3[%c0_23, %c0_24], %55 {strides = array<i32>} : memref<1x1xf32, #tpu.memory_space<vmem>>, vector<1x1xf32>,
    } else {
    }
    %c0 = arith.constant 0 : index
    %c0_1 = arith.constant 0 : index
    %3 = vector.load %arg1[%c0, %c0_1] : memref<16x32xf32, #tpu.memory_space<vmem>>, vector<16x32xf32>
    %cst = arith.constant dense<0xFF800000> : vector<16xf32>
    %4 = vector.multi_reduction <maximumf>, %3, %cst [1] : vector<16x32xf32> to vector<16xf32>
    %5 = vector.shape_cast %4 : vector<16xf32> to vector<16x1xf32>
    %6 = vector.broadcast %5 : vector<16x1xf32> to vector<16x32xf32>
    %7 = arith.subf %3, %6 : vector<16x32xf32>
    %8 = math.exp %7 : vector<16x32xf32>
    %cst_2 = arith.constant dense<0.000000e+00> : vector<16xf32>
    %9 = vector.multi_reduction <add>, %8, %cst_2 [1] : vector<16x32xf32> to vector<16xf32>
    %10 = vector.shape_cast %9 : vector<16xf32> to vector<16x1xf32>
    %11 = math.log %10 : vector<16x1xf32>
    %cst_3 = arith.constant dense<0.000000e+00> : vector<16xf32>
    %12 = vector.multi_reduction <add>, %3, %cst_3 [1] : vector<16x32xf32> to vector<16xf32>
    %13 = vector.shape_cast %12 : vector<16xf32> to vector<16x1xf32>
    %14 = tpu.iota {dimensions = array<i32: 1>} : vector<16x32xi32>
    %c0_4 = arith.constant 0 : index
    %c0_5 = arith.constant 0 : index
    %15 = vector.load %arg2[%c0_4, %c0_5] : memref<16x1xi32, #tpu.memory_space<vmem>>, vector<16x1xi32>
    %16 = vector.broadcast %15 : vector<16x1xi32> to vector<16x32xi32>
    %17 = arith.cmpi eq, %14, %16 : vector<16x32xi32>
    %cst_6 = arith.constant 0.000000e+00 : f32
    %18 = vector.broadcast %cst_6 : f32 to vector<16x32xf32>
    %19 = arith.select %17, %3, %18 : vector<16x32xi1>, vector<16x32xf32>
    %cst_7 = arith.constant dense<0.000000e+00> : vector<16xf32>
    %20 = vector.multi_reduction <add>, %19, %cst_7 [1] : vector<16x32xf32> to vector<16xf32>
    %21 = vector.shape_cast %20 : vector<16xf32> to vector<16x1xf32>
    %22 = arith.subf %21, %5 : vector<16x1xf32>
    %23 = arith.subf %22, %11 : vector<16x1xf32>
    %cst_8 = arith.constant 0.899999976 : f32
    %24 = vector.broadcast %cst_8 : f32 to vector<16x1xf32>
    %25 = arith.mulf %24, %23 : vector<16x1xf32>
    %cst_9 = arith.constant 1.000000e-01 : f32
    %cst_10 = arith.constant 3.200000e+01 : f32
    %26 = arith.divf %cst_9, %cst_10 : f32
    %27 = arith.addf %5, %11 : vector<16x1xf32>
    %cst_11 = arith.constant 3.200000e+01 : f32
    %28 = vector.broadcast %cst_11 : f32 to vector<16x1xf32>
    %29 = arith.mulf %28, %27 : vector<16x1xf32>
    %30 = arith.subf %13, %29 : vector<16x1xf32>
    %31 = vector.broadcast %26 : f32 to vector<16x1xf32>
    %32 = arith.mulf %31, %30 : vector<16x1xf32>
    %33 = arith.addf %25, %32 : vector<16x1xf32>
    %cst_12 = arith.constant 0.000000e+00 : f32
    %34 = vector.broadcast %cst_12 : f32 to vector<16x1xf32>
    %35 = arith.subf %34, %33 : vector<16x1xf32>
    %c16_i32 = arith.constant 16 : i32
    %36 = arith.muli %arg0, %c16_i32 : i32
    %37 = tpu.iota {dimensions = array<i32: 0>} : vector<16x1xi32>
    %38 = vector.broadcast %36 : i32 to vector<16x1xi32>
    %39 = arith.addi %38, %37 : vector<16x1xi32>
    %c16_i32_13 = arith.constant 16 : i32
    %40 = vector.broadcast %c16_i32_13 : i32 to vector<16x1xi32>
    %41 = arith.cmpi slt, %39, %40 : vector<16x1xi32>
    %cst_14 = arith.constant 0.000000e+00 : f32
    %42 = vector.broadcast %cst_14 : f32 to vector<16x1xf32>
    %43 = arith.select %41, %35, %42 : vector<16x1xi1>, vector<16x1xf32>
    %c0_15 = arith.constant 0 : index
    %c0_16 = arith.constant 0 : index
    %44 = vector.load %arg3[%c0_15, %c0_16] : memref<1x1xf32, #tpu.memory_space<vmem>>, vector<1x1xf32>
    %45 = vector.shape_cast %43 : vector<16x1xf32> to vector<1x16x1xf32>
    %cst_17 = arith.constant dense<0.000000e+00> : vector<1xf32>
    %46 = vector.multi_reduction <add>, %45, %cst_17 [1, 2] : vector<1x16x1xf32> to vector<1xf32>
    %47 = vector.shape_cast %46 : vector<1xf32> to vector<1x1x1xf32>
    %48 = vector.extract %47[0, 0, 0] : f32 from vector<1x1x1xf32>
    %49 = vector.broadcast %48 : f32 to vector<1x1xf32>
    %50 = arith.addf %44, %49 : vector<1x1xf32>
    %c0_18 = arith.constant 0 : index
    %c0_19 = arith.constant 0 : index
    %51 = vector.load %arg3[%c0_18, %c0_19] : memref<1x1xf32, #tpu.memory_space<vmem>>, vector<1x1xf32>
    tpu.vector_store %arg3[%c0_18, %c0_19], %50 {strides = array<i32>} : memref<1x1xf32, #tpu.memory_space<vmem>>, vector<1x1xf32>,
    %c0_i32_20 = arith.constant 0 : i32
    %52 = arith.cmpi eq, %arg0, %c0_i32_20 : i32
    %53 = arith.extui %52 : i1 to i32
    %c0_i32_21 = arith.constant 0 : i32
    %54 = arith.cmpi ne, %53, %c0_i32_21 : i32
    scf.if %54 {
      %c0_22 = arith.constant 0 : index
      %c0_23 = arith.constant 0 : index
      %55 = vector.load %arg3[%c0_22, %c0_23] : memref<1x1xf32, #tpu.memory_space<vmem>>, vector<1x1xf32>
      %cst_24 = arith.constant 6.250000e-02 : f32
      %56 = vector.broadcast %cst_24 : f32 to vector<1x1xf32>
      %57 = arith.mulf %55, %56 : vector<1x1xf32>
      %c0_25 = arith.constant 0 : index
      %c0_26 = arith.constant 0 : index
      %58 = vector.load %arg3[%c0_25, %c0_26] : memref<1x1xf32, #tpu.memory_space<vmem>>, vector<1x1xf32>
      tpu.vector_store %arg3[%c0_25, %c0_26], %57 {strides = array<i32>} : memref<1x1xf32, #tpu.memory_space<vmem>>, vector<1x1xf32>,
    } else {
    }
    return
  }
  func.func @transform_0(%arg0: i32) -> (i32, i32) {
    %c0_i32 = arith.constant 0 : i32
    %c0_i32_0 = arith.constant 0 : i32
    return %arg0, %c0_i32 : i32, i32
  }
  func.func @transform_1(%arg0: i32) -> (i32, i32) {
    %c0_i32 = arith.constant 0 : i32
    %c0_i32_0 = arith.constant 0 : i32
    return %arg0, %c0_i32 : i32, i32
  }
  func.func @transform_2(%arg0: i32) -> (i32, i32) {
    %c0_i32 = arith.constant 0 : i32
    %c0_i32_0 = arith.constant 0 : i32
    %c0_i32_1 = arith.constant 0 : i32
    return %c0_i32, %c0_i32_0 : i32, i32
  }
}

</mosaic_0001>

<llo_original>
// kernel: tpu_custom_call.1
$region0: #{tpu_custom_call.1}
  #allocation0 [shape = 'u32[]', space=smem, size = 0x4, offset = 0x4, fixed_abs, tag = 'smem constant byte address 0x4 - core index']
  #allocation1 [shape = 'u32[72,128]{1,0:T(1,128)}', space=vmem, size = 0x9000, scoped, tag = 'internal scratch']
  %s0 = inlined_call_operand.vmem [shape: f32[16,32], index: 0, kind: input, shape index: {}]
  %s1 = inlined_call_operand.vmem [shape: s32[16,1], index: 1, kind: input, shape index: {}]
  %s2 = inlined_call_operand.hbm [shape: f32[1,1], index: 2, kind: output, shape index: {}]
  %s3 = sld [smem:[#allocation0]]
  $region26: #{tpu_custom_call.1} parent=0
    _
  %s5 = ssub.s32 1, %s3
  %s6 = scalar_select 0, %s5, %s3
  $region1: #{tpu_custom_call.1} parent=0
    #allocation2 [shape = 'u8[512]{0}', space=vmem, size = 0x400, scoped, tag = 'output window, operand 0, single buffered']
    #allocation3 [shape = 's32[1]{0}', space=sflag, size = 0x4, scoped, tag = 'scoped memory for tpu_custom_call.1']
    %7 = vsyncpa [#allocation3], 0
    // Predicated region
    $region2: #{tpu_custom_call.1} parent=1 // pred_check
      _
    $region3: #{tpu_custom_call.1} parent=1 // pred_check_branch
      %9 = sbr.rel (0) target = $region5
    $region4: #{tpu_custom_call.1} parent=1 // pred_region
      _
    $region5: #{tpu_custom_call.1} parent=1 // pred_fallthru
      _
    // Predicated region
    $region6: #{tpu_custom_call.1} parent=1 // pred_check
      _
    $region7: #{tpu_custom_call.1} parent=1 // pred_check_branch
      %11 = sbr.rel (0) target = $region9
    $region8: #{tpu_custom_call.1} parent=1 // pred_region
      _
    $region9: #{tpu_custom_call.1} parent=1 // pred_fallthru
      _
    %p12 = scmp.eq.s32.totalorder 0, 0
    // Predicated region
    $region10: #{tpu_custom_call.1} parent=1 // pred_check
      %p13 = pneg %p12
    $region11: #{tpu_custom_call.1} parent=1 // pred_check_branch
      %15 = sbr.rel (%p13) target = $region13
    $region12: #{tpu_custom_call.1} parent=1 // pred_region
      %vm16 = vcmask 0
      %17 = vst.msk [vmem:[#allocation2] sm:$0x1] %vm16, 0.0
    $region13: #{tpu_custom_call.1} parent=1 // pred_fallthru
      _
    %v18 = vld [vmem:[%s0] sm:$0xff]
    %v19 = vld [vmem:[%s0 + $0x8] sm:$0xff]
    %vm20 = vcmask 261120
    %v21 = vsel %vm20, %v18, -inf
    %22 = vmax.xlane.f32.xlu0 %v21
    %v23 = vpop.xlane.xlu0 %22
    %v24 = vsel %vm20, %v19, -inf
    %25 = vmax.xlane.f32.xlu0 %v24
    %v26 = vpop.xlane.xlu0 %25
    %v27 = vsub.f32 %v18, %v23
    %v28 = vsub.f32 %v19, %v26
    %v29 = vmul.f32 %v27, 1.442695
    %v30 = vpow.pop %v29
    %v31 = vmul.f32 %v28, 1.442695
    %v32 = vpow.pop %v31
    %v33 = vsel %vm20, %v30, 0.0
    %34 = vadd.xlane.f32.xlu0 %v33
    %v35 = vpop.xlane.xlu0 %34
    %v36 = vsel %vm20, %v32, 0.0
    %37 = vadd.xlane.f32.xlu0 %v36
    %v38 = vpop.xlane.xlu0 %37
    %v39 = vlog2.pop %v35
    %v40 = vmul.f32 %v39, 0.6931472
    %v41 = vlog2.pop %v38
    %v42 = vmul.f32 %v41, 0.6931472
    %v43 = vsel %vm20, %v18, 0.0
    %44 = vadd.xlane.f32.xlu0 %v43
    %v45 = vpop.xlane.xlu0 %44
    %v46 = vsel %vm20, %v19, 0.0
    %47 = vadd.xlane.f32.xlu0 %v46
    %v48 = vpop.xlane.xlu0 %47
    %v49 = vlaneseq
    %v50 = vand.u32 %v49, 127
    %v51 = vld [vmem:[%s1] sm:$0xff]
    %v52 = vld [vmem:[%s1 + $0x8] sm:$0xff]
    %53 = vset.pattern.permute.xlu0 0
    %54 = vperm.xlu0 %53, %v51
    %v55 = vpop.permute.xlu0 %54
    %56 = vset.pattern.permute.xlu0 0
    %57 = vperm.xlu0 %56, %v52
    %v58 = vpop.permute.xlu0 %57
    %vm59 = vcmp.eq.s32.totalorder %v50, %v55
    %vm60 = vcmp.eq.s32.totalorder %v50, %v58
    %v61 = vsel %vm59, %v18, 0.0
    %v62 = vsel %vm60, %v19, 0.0
    %v63 = vsel %vm20, %v61, 0.0
    %64 = vadd.xlane.f32.xlu0 %v63
    %v65 = vpop.xlane.xlu0 %64
    %v66 = vsel %vm20, %v62, 0.0
    %67 = vadd.xlane.f32.xlu0 %v66
    %v68 = vpop.xlane.xlu0 %67
    %v69 = vsub.f32 %v65, %v23
    %v70 = vsub.f32 %v68, %v26
    %v71 = vsub.f32 %v69, %v40
    %v72 = vsub.f32 %v70, %v42
    %v73 = vmul.f32 %v71, 0.9
    %v74 = vmul.f32 %v72, 0.9
    %v75 = vadd.f32 %v23, %v40
    %v76 = vadd.f32 %v26, %v42
    %v77 = vmul.f32 %v75, 32.0
    %v78 = vmul.f32 %v76, 32.0
    %v79 = vsub.f32 %v45, %v77
    %v80 = vsub.f32 %v48, %v78
    %v81 = vmul.f32 %v79, 0.003125
    %v82 = vmul.f32 %v80, 0.003125
    %v83 = vadd.f32 %v73, %v81
    %v84 = vadd.f32 %v74, %v82
    %v85 = vsub.f32 0.0, %v83
    %v86 = vsub.f32 0.0, %v84
    %s87 = smul.u32 0, 16
    %v88 = vlaneseq
    %v89 = vshrl.u32 %v88, 7
    %v90 = vadd.s32 %v89, 8
    %v91 = vstv %s87
    %v92 = vadd.s32 %v91, %v89
    %v93 = vadd.s32 %v91, %v90
    %vm94 = vcmp.lt.s32.totalorder %v92, 16
    %vm95 = vcmp.lt.s32.totalorder %v93, 16
    %v96 = vsel %vm94, %v85, 0.0
    %v97 = vsel %vm95, %v86, 0.0
    %v98 = vld [vmem:[#allocation2] sm:$0x1]
    %vm99 = vcmask 7168
    %v100 = vsel %vm99, %v96, 0.0
    %v101 = vsel %vm99, %v97, 0.0
    %v102 = vadd.f32 %v100, %v101
    %103 = vadd.xlane.f32.xlu0 %v102
    %v104 = vpop.xlane.xlu0 %103
    %v105 = vrot.slane %v104, 4
    %v106 = vadd.f32 %v104, %v105
    %v107 = vrot.slane %v106, 2
    %v108 = vadd.f32 %v106, %v107
    %v109 = vrot.slane %v108, 1
    %v110 = vadd.f32 %v108, %v109
    %s111 = vtos %v110
    %v112 = vstv %s111
    %v113 = vadd.f32 %v98, %v112
    %vm114 = vcmask 0
    %115 = vst.msk [vmem:[#allocation2] sm:$0x1] %vm114, %v113
    // Predicated region
    $region14: #{tpu_custom_call.1} parent=1 // pred_check
      %p116 = pneg %p12
    $region15: #{tpu_custom_call.1} parent=1 // pred_check_branch
      %118 = sbr.rel (%p116) target = $region17
    $region16: #{tpu_custom_call.1} parent=1 // pred_region
      %v119 = vld [vmem:[#allocation2] sm:$0x1]
      %v120 = vmul.f32 %v119, 0.0625
      %121 = vst.msk [vmem:[#allocation2] sm:$0x1] %vm114, %v120
    $region17: #{tpu_custom_call.1} parent=1 // pred_fallthru
      _
    // Predicated region
    $region18: #{tpu_custom_call.1} parent=1 // pred_check
      _
    $region19: #{tpu_custom_call.1} parent=1 // pred_check_branch
      %123 = sbr.rel (0) target = $region21
    $region20: #{tpu_custom_call.1} parent=1 // pred_region
      %125 = vsyncadd [#allocation3], 0
      %s127 = sshll.u32 [#allocation2], 4
      %s128 = int_to_ptr.vmem [resolvable:$true] %s127
      %s129 = sshll.u32 %s2, 4
      %s130 = int_to_ptr.hbm [resolvable:$true] %s129
      %132 = dma.vmem_to_hbm [thread:$0]  %s128, 16, %s130, [#allocation3]
    $region21: #{tpu_custom_call.1} parent=1 // pred_fallthru
      _
    // Predicated region
    $region22: #{tpu_custom_call.1} parent=1 // pred_check
      _
    $region23: #{tpu_custom_call.1} parent=1 // pred_check_branch
      %134 = sbr.rel (0) target = $region25
    $region24: #{tpu_custom_call.1} parent=1 // pred_region
      %136 = dma.done [#allocation3], 16
    $region25: #{tpu_custom_call.1} parent=1 // pred_fallthru
      _
    %137 = vsyncpa [#allocation3], 1

</llo_original>
